<compile_context>
chip_gen: v7x
topology: tpu7x:2x2x1
jax: 0.10.0
libtpu: 0.0.40
codegen_flags: <defaults>
</compile_context>

<pallas_src>
import functools

import jax
import jax.numpy as jnp
from jax.experimental import pallas as pl
from jax.experimental.pallas import tpu as pltpu


def _actor_kernel(x_ref, w1_ref, b1_ref, w2_ref, b2_ref, out_ref):
    # Hidden layer: (B, S) @ (S, H) + (1, H), ReLU.
    # Weights arrive pre-cast to bf16; x is cast here if it is f32 (no-op if
    # the caller already supplies bf16). f32 accumulation on the MXU.
    x = x_ref[...].astype(jnp.bfloat16)
    h = jnp.dot(x, w1_ref[...], preferred_element_type=jnp.float32)
    h = jnp.maximum(h + b1_ref[...], 0.0)

    # Action head: (B, H) @ (H, A) + (1, A).
    logits = jnp.dot(h.astype(jnp.bfloat16), w2_ref[...],
                     preferred_element_type=jnp.float32)
    logits = logits + b2_ref[...]

    # Numerically-stable softmax over the action axis (PyTorch dim=1).
    # All in f32; exact division so rows sum to 1 (no approx reciprocal).
    m = jnp.max(logits, axis=-1, keepdims=True)
    e = jnp.exp(logits - m)
    denom = jnp.sum(e, axis=-1, keepdims=True)
    out_ref[...] = (e / denom).astype(out_ref.dtype)


@functools.partial(jax.jit, static_argnames=("block_b",))
def actor_forward(x, w1, b1, w2, b2, *, block_b=4096):
    """x: (B, state_space) f32 or bf16 -> action probs (B, action_space) f32."""
    batch, state_space = x.shape
    hidden = w1.shape[1]
    action_space = w2.shape[1]

    # Keep the batch tile a multiple of 8 (sublane constraint).
    block_b = max(8, (block_b // 8) * 8)

    # One-time (tiny) casts: MXU operands in bf16, biases stay f32.
    w1b = w1.astype(jnp.bfloat16)
    w2b = w2.astype(jnp.bfloat16)

    cost = pl.CostEstimate(
        flops=2 * batch * (state_space * hidden + hidden * action_space),
        transcendentals=batch * action_space,
        bytes_accessed=(batch * state_space * x.dtype.itemsize
                        + batch * action_space * 4
                        + w1b.size * 2 + w2b.size * 2
                        + b1.size * 4 + b2.size * 4),
    )

    if batch <= block_b:
        # Single invocation: the whole problem (a few MB at most) fits in
        # VMEM. No grid -> no pipeline prologue/epilogue or per-step overhead.
        return pl.pallas_call(
            _actor_kernel,
            out_shape=jax.ShapeDtypeStruct((batch, action_space), jnp.float32),
            cost_estimate=cost,
        )(x, w1b, b1, w2b, b2)

    # Batched path: tile the batch axis with a (possibly non-divisible) grid.
    # No padding / slicing in the wrapper: Pallas masks the partial last block
    # (OOB rows are read as garbage but their writes are dropped; softmax is
    # row-wise so they never contaminate valid rows). Weights/biases stay
    # VMEM-resident across steps (index_map always returns block (0, 0)) and
    # the independent batch axis is "parallel" so v7x's 2 TCs split the work
    # (>= 2 steps guaranteed since batch > block_b here).
    grid = (pl.cdiv(batch, block_b),)
    return pl.pallas_call(
        _actor_kernel,
        out_shape=jax.ShapeDtypeStruct((batch, action_space), jnp.float32),
        grid=grid,
        in_specs=[
            pl.BlockSpec((block_b, state_space), lambda i: (i, 0)),
            pl.BlockSpec((state_space, hidden), lambda i: (0, 0)),
            pl.BlockSpec((1, hidden), lambda i: (0, 0)),
            pl.BlockSpec((hidden, action_space), lambda i: (0, 0)),
            pl.BlockSpec((1, action_space), lambda i: (0, 0)),
        ],
        out_specs=pl.BlockSpec((block_b, action_space), lambda i: (i, 0)),
        compiler_params=pltpu.CompilerParams(
            dimension_semantics=("parallel",),
            vmem_limit_bytes=32 * 1024 * 1024),
        cost_estimate=cost,
    )(x, w1b, b1, w2b, b2)


def _orthogonal(key, shape, gain):
    """Deterministic orthogonal init (mirrors nn.init.orthogonal_ with gain)."""
    rows, cols = shape
    n = max(rows, cols)
    a = jax.random.normal(key, (n, n), dtype=jnp.float32)
    q, r = jnp.linalg.qr(a)
    q = q * jnp.sign(jnp.diag(r))  # sign correction for a unique decomposition
    return gain * q[:rows, :cols]


def init_actor_params(key, state_space, action_space, hidden_size=64):
    """Matches Actor.__init__ with init_type='orthogonal' (gain=sqrt(2)),
    biases zeroed. Weights stored as (in, out)."""
    std = 2.0 ** 0.5
    k1, k2 = jax.random.split(key)
    w1 = _orthogonal(k1, (state_space, hidden_size), std)   # linear_in
    b1 = jnp.zeros((1, hidden_size), dtype=jnp.float32)
    w2 = _orthogonal(k2, (hidden_size, action_space), std)  # action_head
    b2 = jnp.zeros((1, action_space), dtype=jnp.float32)
    return w1, b1, w2, b2


if __name__ == "__main__":
    state_space, action_space, hidden_size = 32, 8, 64

    key = jax.random.PRNGKey(0)
    k_x, k_x2, k_p = jax.random.split(key, 3)
    w1, b1, w2, b2 = init_actor_params(k_p, state_space, action_space,
                                       hidden_size)

    def ref_probs_bf16(x):
        # Same bf16-operand / f32-accumulate contraction as the kernel.
        h = jnp.maximum(
            jnp.dot(x.astype(jnp.bfloat16), w1.astype(jnp.bfloat16),
                    preferred_element_type=jnp.float32) + b1, 0.0)
        logits = jnp.dot(h.astype(jnp.bfloat16), w2.astype(jnp.bfloat16),
                         preferred_element_type=jnp.float32) + b2
        return jax.nn.softmax(logits, axis=1)

    def ref_probs_f32(x):
        # Pure-f32 PyTorch-semantics reference.
        h = jnp.maximum(x @ w1 + b1, 0.0)
        return jax.nn.softmax(h @ w2 + b2, axis=1)

    # Small batch -> single-invocation (no-grid) path.
    x_small = jax.random.normal(k_x, (8, state_space), dtype=jnp.float32)
    p_small = jax.block_until_ready(actor_forward(x_small, w1, b1, w2, b2))
    assert p_small.shape == (8, action_space)
    assert jnp.allclose(jnp.sum(p_small, axis=1), 1.0, atol=1e-3)
    assert jnp.allclose(p_small, ref_probs_bf16(x_small), atol=2e-3)
    assert jnp.allclose(p_small, ref_probs_f32(x_small), atol=5e-2)

    # Larger, non-divisible batch -> batch-tiled, batch-parallel grid path
    # (exercises the masked partial last block: 600 = 2*256 + 88).
    x_big = jax.random.normal(k_x2, (600, state_space), dtype=jnp.float32)
    p_big = jax.block_until_ready(
        actor_forward(x_big, w1, b1, w2, b2, block_b=256))
    assert p_big.shape == (600, action_space)
    assert jnp.allclose(jnp.sum(p_big, axis=1), 1.0, atol=1e-3)
    assert jnp.allclose(p_big, ref_probs_bf16(x_big), atol=2e-3)

    print("KERNEL_OK")
</pallas_src>

<mosaic_0001>
module attributes {stable_mosaic.version = 11 : i64} {
  func.func @_actor_kernel(%arg0: memref<8x32xf32, #tpu.memory_space<vmem>>, %arg1: memref<32x64xbf16, #tpu.memory_space<vmem>>, %arg2: memref<1x64xf32, #tpu.memory_space<vmem>>, %arg3: memref<64x8xbf16, #tpu.memory_space<vmem>>, %arg4: memref<1x8xf32, #tpu.memory_space<vmem>>, %arg5: memref<8x8xf32, #tpu.memory_space<vmem>>) attributes {dimension_semantics = [], scalar_prefetch = 0 : i64, scratch_operands = 0 : i64, tpu.core_type = #tpu.core_type<tc>} {
    %c0 = arith.constant 0 : index
    %c0_0 = arith.constant 0 : index
    %0 = vector.load %arg0[%c0, %c0_0] : memref<8x32xf32, #tpu.memory_space<vmem>>, vector<8x32xf32>
    %1 = arith.truncf %0 : vector<8x32xf32> to vector<8x32xbf16>
    %c0_1 = arith.constant 0 : index
    %c0_2 = arith.constant 0 : index
    %2 = vector.load %arg1[%c0_1, %c0_2] : memref<32x64xbf16, #tpu.memory_space<vmem>>, vector<32x64xbf16>
    %cst = arith.constant dense<0.000000e+00> : vector<8x64xf32>
    %3 = tpu.matmul %1, %2, %cst {dimension_numbers = #tpu.dot_dimension_numbers<[1], [0], [0], [1], [0, 0, 1, 1], [], []>} : vector<8x32xbf16>, vector<32x64xbf16>, vector<8x64xf32> -> vector<8x64xf32>
    %c0_3 = arith.constant 0 : index
    %c0_4 = arith.constant 0 : index
    %4 = vector.load %arg2[%c0_3, %c0_4] : memref<1x64xf32, #tpu.memory_space<vmem>>, vector<1x64xf32>
    %5 = vector.broadcast %4 : vector<1x64xf32> to vector<8x64xf32>
    %6 = arith.addf %3, %5 : vector<8x64xf32>
    %cst_5 = arith.constant 0.000000e+00 : f32
    %7 = vector.broadcast %cst_5 : f32 to vector<8x64xf32>
    %8 = arith.maximumf %6, %7 : vector<8x64xf32>
    %9 = arith.truncf %8 : vector<8x64xf32> to vector<8x64xbf16>
    %c0_6 = arith.constant 0 : index
    %c0_7 = arith.constant 0 : index
    %10 = vector.load %arg3[%c0_6, %c0_7] : memref<64x8xbf16, #tpu.memory_space<vmem>>, vector<64x8xbf16>
    %cst_8 = arith.constant dense<0.000000e+00> : vector<8x8xf32>
    %11 = tpu.matmul %9, %10, %cst_8 {dimension_numbers = #tpu.dot_dimension_numbers<[1], [0], [0], [1], [0, 0, 1, 1], [], []>} : vector<8x64xbf16>, vector<64x8xbf16>, vector<8x8xf32> -> vector<8x8xf32>
    %c0_9 = arith.constant 0 : index
    %c0_10 = arith.constant 0 : index
    %12 = vector.load %arg4[%c0_9, %c0_10] : memref<1x8xf32, #tpu.memory_space<vmem>>, vector<1x8xf32>
    %13 = vector.broadcast %12 : vector<1x8xf32> to vector<8x8xf32>
    %14 = arith.addf %11, %13 : vector<8x8xf32>
    %cst_11 = arith.constant dense<0xFF800000> : vector<8xf32>
    %15 = vector.multi_reduction <maximumf>, %14, %cst_11 [1] : vector<8x8xf32> to vector<8xf32>
    %16 = vector.shape_cast %15 : vector<8xf32> to vector<8x1xf32>
    %17 = vector.broadcast %16 : vector<8x1xf32> to vector<8x8xf32>
    %18 = arith.subf %14, %17 : vector<8x8xf32>
    %19 = math.exp %18 : vector<8x8xf32>
    %cst_12 = arith.constant dense<0.000000e+00> : vector<8xf32>
    %20 = vector.multi_reduction <add>, %19, %cst_12 [1] : vector<8x8xf32> to vector<8xf32>
    %21 = vector.shape_cast %20 : vector<8xf32> to vector<8x1xf32>
    %22 = vector.broadcast %21 : vector<8x1xf32> to vector<8x8xf32>
    %23 = arith.divf %19, %22 : vector<8x8xf32>
    %c0_13 = arith.constant 0 : index
    %c0_14 = arith.constant 0 : index
    %24 = vector.load %arg5[%c0_13, %c0_14] : memref<8x8xf32, #tpu.memory_space<vmem>>, vector<8x8xf32>
    tpu.vector_store %arg5[%c0_13, %c0_14], %23 {strides = array<i32>} : memref<8x8xf32, #tpu.memory_space<vmem>>, vector<8x8xf32>,
    return
  }
}

</mosaic_0001>

<llo_original>
// kernel: actor_forward.1
$region0: #{actor_forward.1}
  #allocation0 [shape = 'u32[]', space=smem, size = 0x4, offset = 0x4, fixed_abs, tag = 'smem constant byte address 0x4 - core index']
  #allocation1 [shape = 'u32[144,128]{1,0:T(1,128)}', space=vmem, size = 0x12000, scoped, tag = 'internal scratch']
  %s0 = inlined_call_operand.vmem [shape: f32[8,32], index: 0, kind: input, shape index: {}]
  %s1 = inlined_call_operand.vmem [shape: bf16[32,64], index: 1, kind: input, shape index: {}]
  %s2 = inlined_call_operand.vmem [shape: f32[1,64], index: 2, kind: input, shape index: {}]
  %s3 = inlined_call_operand.vmem [shape: bf16[64,8], index: 3, kind: input, shape index: {}]
  %s4 = inlined_call_operand.vmem [shape: f32[1,8], index: 4, kind: input, shape index: {}]
  %s5 = inlined_call_operand.hbm [shape: f32[8,8], index: 5, kind: output, shape index: {}]
  %s6 = sld [smem:[#allocation0]]
  $region30: #{actor_forward.1} parent=0
    _
  %s8 = ssub.s32 1, %s6
  %s9 = scalar_select 0, %s8, %s6
  $region1: #{actor_forward.1} parent=0
    #allocation2 [shape = 'u8[4096]{0}', space=vmem, size = 0x1000, scoped, tag = 'output window, operand 0, single buffered']
    #allocation3 [shape = 's32[1]{0}', space=sflag, size = 0x4, scoped, tag = 'scoped memory for actor_forward.1']
    %10 = vsyncpa [#allocation3], 0
    // Predicated region
    $region2: #{actor_forward.1} parent=1 // pred_check
      _
    $region3: #{actor_forward.1} parent=1 // pred_check_branch
      %12 = sbr.rel (0) target = $region5
    $region4: #{actor_forward.1} parent=1 // pred_region
      _
    $region5: #{actor_forward.1} parent=1 // pred_fallthru
      _
    // Predicated region
    $region6: #{actor_forward.1} parent=1 // pred_check
      _
    $region7: #{actor_forward.1} parent=1 // pred_check_branch
      %14 = sbr.rel (0) target = $region9
    $region8: #{actor_forward.1} parent=1 // pred_region
      _
    $region9: #{actor_forward.1} parent=1 // pred_fallthru
      _
    // Predicated region
    $region10: #{actor_forward.1} parent=1 // pred_check
      _
    $region11: #{actor_forward.1} parent=1 // pred_check_branch
      %16 = sbr.rel (0) target = $region13
    $region12: #{actor_forward.1} parent=1 // pred_region
      _
    $region13: #{actor_forward.1} parent=1 // pred_fallthru
      _
    // Predicated region
    $region14: #{actor_forward.1} parent=1 // pred_check
      _
    $region15: #{actor_forward.1} parent=1 // pred_check_branch
      %18 = sbr.rel (0) target = $region17
    $region16: #{actor_forward.1} parent=1 // pred_region
      _
    $region17: #{actor_forward.1} parent=1 // pred_fallthru
      _
    // Predicated region
    $region18: #{actor_forward.1} parent=1 // pred_check
      _
    $region19: #{actor_forward.1} parent=1 // pred_check_branch
      %20 = sbr.rel (0) target = $region21
    $region20: #{actor_forward.1} parent=1 // pred_region
      _
    $region21: #{actor_forward.1} parent=1 // pred_fallthru
      _
    %v22 = vld [vmem:[%s0] sm:$0xff]
    %v23 = vpack.c.bf16 %v22, %v22
    %v24 = vld [vmem:[%s1] sm:$0xf]
    %v25 = vld [vmem:[%s1 + $0x4] sm:$0xf]
    %v26 = vld [vmem:[%s1 + $0x8] sm:$0xf]
    %v27 = vld [vmem:[%s1 + $0xc] sm:$0xf]
    %v28 = vld [vmem:[%s2] sm:$0x1]
    %v30 = vlaneseq
    %v31 = vshrl.u32 %v30, 7
    %v32 = vsub.s32 0, %v31
    %v33 = vrot.slane %v28, %v32
    %v39 = vunpack.c.l.b16 %v24
    %v40 = vunpack.c.l.b16 %v25
    %v41 = vunpack.c.l.b16 %v26
    %v42 = vunpack.c.l.b16 %v27
    %v43 = vpack.c.b16 %v40, %v39
    %v44 = vpack.c.b16 %v42, %v41
    %vm47 = vcmask 261120
    %v49 = vsel %vm47, %v23, 0
    %51 = vmatprep.subr.bf16.mxu0 0
    %52 = vmatpush1.bf16.msra.mxu0 %v43
    %53 = vmatprep.subr.bf16.mxu0 0
    %54 = vmatpush1.bf16.msra.mxu0 %v44
    %55 = vmatprep.subr.bf16.mxu0 0
    %56 = vmatpush1.bf16.msra.mxu0 0
    %57 = vmatprep.subr.bf16.mxu0 0
    %58 = vmatpush1.bf16.msra.mxu0 0
    %59 = vmatprep.subr.bf16.mxu0 0
    %60 = vmatpush1.bf16.msra.mxu0 0
    %61 = vmatprep.subr.bf16.mxu0 0
    %62 = vmatpush1.bf16.msra.mxu0 0
    %63 = vmatprep.subr.bf16.mxu0 0
    %64 = vmatpush1.bf16.msra.mxu0 0
    %65 = vmatprep.subr.bf16.mxu0 0
    %66 = vmatpush1.bf16.msra.mxu0 0
    %67 = vmatprep.subr.bf16.mxu0 0
    %68 = vmatpush1.bf16.msra.mxu0 0
    %69 = vmatprep.subr.bf16.mxu0 0
    %70 = vmatpush1.bf16.msra.mxu0 0
    %71 = vmatprep.subr.bf16.mxu0 0
    %72 = vmatpush1.bf16.msra.mxu0 0
    %73 = vmatprep.subr.bf16.mxu0 0
    %74 = vmatpush1.bf16.msra.mxu0 0
    %75 = vmatprep.subr.bf16.mxu0 0
    %76 = vmatpush1.bf16.msra.mxu0 0
    %77 = vmatprep.subr.bf16.mxu0 0
    %78 = vmatpush1.bf16.msra.mxu0 0
    %79 = vmatprep.subr.bf16.mxu0 0
    %80 = vmatpush1.bf16.msra.mxu0 0
    %81 = vmatprep.subr.bf16.mxu0 0
    %82 = vmatpush1.bf16.msra.mxu0 0
    %83 = vmatprep.mubr.bf16.mxu0 0
    %84 = vmatmul.mubr.bf16.gmra.mrb[0].mxu0 %v49
    %v85 = vpop.f32.mrb[0].mxu0
    %v86 = vadd.f32 %v33, %v85
    %v87 = vpop.f32.mrb[0].mxu0
    %v88 = vpop.f32.mrb[0].mxu0
    %v89 = vpop.f32.mrb[0].mxu0
    %90 = vdwg.mxu0
    %v91 = vmax.f32 %v86, 0.0
    %v92 = vpack.c.bf16 %v91, %v91
    %v93 = vld [vmem:[%s3] sm:$0xf]
    %v94 = vld [vmem:[%s3 + $0x4] sm:$0xf]
    %v95 = vld [vmem:[%s3 + $0x8] sm:$0xf]
    %v96 = vld [vmem:[%s3 + $0xc] sm:$0xf]
    %v97 = vld [vmem:[%s3 + $0x10] sm:$0xf]
    %v98 = vld [vmem:[%s3 + $0x14] sm:$0xf]
    %v99 = vld [vmem:[%s3 + $0x18] sm:$0xf]
    %v100 = vld [vmem:[%s3 + $0x1c] sm:$0xf]
    %v101 = vld [vmem:[%s4] sm:$0x1]
    %v103 = vlaneseq
    %v104 = vshrl.u32 %v103, 7
    %v105 = vsub.s32 0, %v104
    %v106 = vrot.slane %v101, %v105
    %v116 = vunpack.c.l.b16 %v93
    %v117 = vunpack.c.l.b16 %v94
    %v118 = vunpack.c.l.b16 %v95
    %v119 = vunpack.c.l.b16 %v96
    %v120 = vunpack.c.l.b16 %v97
    %v121 = vunpack.c.l.b16 %v98
    %v122 = vunpack.c.l.b16 %v99
    %v123 = vunpack.c.l.b16 %v100
    %v124 = vpack.c.b16 %v117, %v116
    %v125 = vpack.c.b16 %v119, %v118
    %v126 = vpack.c.b16 %v121, %v120
    %v127 = vpack.c.b16 %v123, %v122
    %vm132 = vcmask 523264
    %v134 = vsel %vm132, %v92, 0
    %136 = vmatprep.subr.bf16.mxu0 0
    %137 = vmatpush1.bf16.msra.mxu0 %v124
    %138 = vmatprep.subr.bf16.mxu0 0
    %139 = vmatpush1.bf16.msra.mxu0 %v125
    %140 = vmatprep.subr.bf16.mxu0 0
    %141 = vmatpush1.bf16.msra.mxu0 %v126
    %142 = vmatprep.subr.bf16.mxu0 0
    %143 = vmatpush1.bf16.msra.mxu0 %v127
    %144 = vmatprep.subr.bf16.mxu0 0
    %145 = vmatpush1.bf16.msra.mxu0 0
    %146 = vmatprep.subr.bf16.mxu0 0
    %147 = vmatpush1.bf16.msra.mxu0 0
    %148 = vmatprep.subr.bf16.mxu0 0
    %149 = vmatpush1.bf16.msra.mxu0 0
    %150 = vmatprep.subr.bf16.mxu0 0
    %151 = vmatpush1.bf16.msra.mxu0 0
    %152 = vmatprep.subr.bf16.mxu0 0
    %153 = vmatpush1.bf16.msra.mxu0 0
    %154 = vmatprep.subr.bf16.mxu0 0
    %155 = vmatpush1.bf16.msra.mxu0 0
    %156 = vmatprep.subr.bf16.mxu0 0
    %157 = vmatpush1.bf16.msra.mxu0 0
    %158 = vmatprep.subr.bf16.mxu0 0
    %159 = vmatpush1.bf16.msra.mxu0 0
    %160 = vmatprep.subr.bf16.mxu0 0
    %161 = vmatpush1.bf16.msra.mxu0 0
    %162 = vmatprep.subr.bf16.mxu0 0
    %163 = vmatpush1.bf16.msra.mxu0 0
    %164 = vmatprep.subr.bf16.mxu0 0
    %165 = vmatpush1.bf16.msra.mxu0 0
    %166 = vmatprep.subr.bf16.mxu0 0
    %167 = vmatpush1.bf16.msra.mxu0 0
    %168 = vmatprep.mubr.bf16.mxu0 0
    %169 = vmatmul.mubr.bf16.gmra.mrb[0].mxu0 %v134
    %v170 = vpop.f32.mrb[0].mxu0
    %v171 = vadd.f32 %v106, %v170
    %v172 = vpop.f32.mrb[0].mxu0
    %v173 = vpop.f32.mrb[0].mxu0
    %v174 = vpop.f32.mrb[0].mxu0
    %175 = vdwg.mxu0
    %vm176 = vcmask 64512
    %v177 = vsel %vm176, %v171, -inf
    %178 = vmax.xlane.f32.xlu0 %v177
    %v179 = vpop.xlane.xlu0 %178
    %v180 = vsub.f32 %v171, %v179
    %v181 = vmul.f32 %v180, 1.442695
    %v182 = vpow.pop %v181
    %v183 = vsel %vm176, %v182, 0.0
    %184 = vadd.xlane.f32.xlu0 %v183
    %v185 = vpop.xlane.xlu0 %184
    %v186 = vrcp.pop %v185
    %v187 = vmul.f32 %v182, %v186
    %188 = vst.msk [vmem:[#allocation2] sm:$0xff] %vm176, %v187
    // Predicated region
    $region22: #{actor_forward.1} parent=1 // pred_check
      _
    $region23: #{actor_forward.1} parent=1 // pred_check_branch
      %190 = sbr.rel (0) target = $region25
    $region24: #{actor_forward.1} parent=1 // pred_region
      %s192 = ssub.s32 128, 128
      %193 = vsyncadd [#allocation3], %s192
      %s195 = sshll.u32 [#allocation2], 4
      %s196 = int_to_ptr.vmem [resolvable:$true] %s195
      %198 = dma.vmem_to_hbm [thread:$0]  %s196, 128, %s5, [#allocation3]
    $region25: #{actor_forward.1} parent=1 // pred_fallthru
      _
    // Predicated region
    $region26: #{actor_forward.1} parent=1 // pred_check
      _
    $region27: #{actor_forward.1} parent=1 // pred_check_branch
      %200 = sbr.rel (0) target = $region29
    $region28: #{actor_forward.1} parent=1 // pred_region
      %201 = dma.done [#allocation3], 128
    $region29: #{actor_forward.1} parent=1 // pred_fallthru
      _
    %202 = vsyncpa [#allocation3], 1

</llo_original>
